<compile_context>
chip_gen: v6e
topology: v6e:2x2x1
jax: 0.10.0
libtpu: 0.0.40
codegen_flags: <defaults>
</compile_context>

<pallas_src>
import jax
import jax.numpy as jnp
from jax.experimental import pallas as pl
from jax.experimental.pallas import tpu as pltpu

INPUT_DIM = 12
HIDDEN_LAYERS = [35, 35, 35]
OUTPUT_DIM = 2

# Padded (lane/sublane friendly) sizes used inside the kernel.
IN_PAD = 16      # input features 12 -> 16 (sublane-aligned contraction dim)
WIDE = 128       # hidden widths 35 -> 128 and output 2 -> 128 (one full lane tile)

# bf16 is MXU-native on v6e/v7x and halves x HBM traffic. On v5e you may set this
# to jnp.float32 (its VPU has no bf16 ALU); bias-add/ReLU are in f32 either way.
COMPUTE_DTYPE = jnp.bfloat16

DEFAULT_TILE_B = 2048

# Row offsets inside the packed parameter slab, shape (SLAB_ROWS, WIDE).
_OFF_W0 = 0                   # (IN_PAD, WIDE)  valid (12, 35)
_OFF_W1 = _OFF_W0 + IN_PAD    # (WIDE,  WIDE)   valid (35, 35)
_OFF_W2 = _OFF_W1 + WIDE      # (WIDE,  WIDE)   valid (35, 35)
_OFF_W3 = _OFF_W2 + WIDE      # (WIDE,  WIDE)   valid (35, 2)
_OFF_B = _OFF_W3 + WIDE       # (8, WIDE): row i = bias of layer i (zero padded)
SLAB_ROWS = _OFF_B + 8        # 16 + 3*128 + 8 = 408  (multiple of 8)


def _round_up(x, m):
    return (x + m - 1) // m * m


def mlp_kernel(x_ref, p_ref, o_ref):
    """One batch tile of the whole 4-layer MLP. Params are VMEM-resident."""
    x = x_ref[...]                                        # (TILE_B, IN_PAD) bf16
    w0 = p_ref[_OFF_W0:_OFF_W0 + IN_PAD, :]               # static slices of the slab
    w1 = p_ref[_OFF_W1:_OFF_W1 + WIDE, :]
    w2 = p_ref[_OFF_W2:_OFF_W2 + WIDE, :]
    w3 = p_ref[_OFF_W3:_OFF_W3 + WIDE, :]
    b0 = p_ref[_OFF_B + 0:_OFF_B + 1, :]                  # (1, WIDE), broadcasts
    b1 = p_ref[_OFF_B + 1:_OFF_B + 2, :]
    b2 = p_ref[_OFF_B + 2:_OFF_B + 3, :]
    b3 = p_ref[_OFF_B + 3:_OFF_B + 4, :]

    # Layer 1 (input_layer) + ReLU
    h = jnp.dot(x, w0, preferred_element_type=jnp.float32)
    h = jnp.maximum(h + b0, 0.0)                          # f32 bias-add / ReLU
    # Hidden linear 1 + ReLU
    h = jnp.dot(h.astype(COMPUTE_DTYPE), w1, preferred_element_type=jnp.float32)
    h = jnp.maximum(h + b1, 0.0)
    # Hidden linear 2 + ReLU
    h = jnp.dot(h.astype(COMPUTE_DTYPE), w2, preferred_element_type=jnp.float32)
    h = jnp.maximum(h + b2, 0.0)
    # Output layer (no activation)
    out = jnp.dot(h.astype(COMPUTE_DTYPE), w3, preferred_element_type=jnp.float32) + b3
    o_ref[...] = out                                      # (TILE_B, WIDE) f32, lane-dense store


def _pad2(a, rows, cols):
    return jnp.pad(a, ((0, rows - a.shape[0]), (0, cols - a.shape[1])))


def pack_params(params, dtype=COMPUTE_DTYPE):
    """Pack PyTorch-layout params [(W (out,in), b (out,)), ...] into one padded slab."""
    (w0, b0), (w1, b1), (w2, b2), (w3, b3) = params
    bias_block = jnp.zeros((8, WIDE), jnp.float32)
    for i, b in enumerate([b0, b1, b2, b3]):
        bias_block = bias_block.at[i, :b.shape[0]].set(b)
    slab = jnp.concatenate(
        [
            _pad2(w0.T, IN_PAD, WIDE),   # (16, 128)
            _pad2(w1.T, WIDE, WIDE),     # (128, 128)
            _pad2(w2.T, WIDE, WIDE),     # (128, 128)
            _pad2(w3.T, WIDE, WIDE),     # (128, 128)
            bias_block,                  # (8, 128)
        ],
        axis=0,
    ).astype(dtype)
    assert slab.shape == (SLAB_ROWS, WIDE), slab.shape
    return slab


def logistic_regression_forward(x, slab, *, tile_b=DEFAULT_TILE_B):
    """x: (B, 12) float32. slab: packed params from pack_params(). Returns (B, 2) f32."""
    batch = x.shape[0]
    assert x.shape[1] == INPUT_DIM, x.shape
    tile_b = min(tile_b, _round_up(max(batch, 1), 8))
    pb = _round_up(batch, tile_b)

    # Cast to the compute dtype, pad features 12->16 and batch to a tile multiple.
    xp = jnp.pad(x, ((0, pb - batch), (0, IN_PAD - INPUT_DIM))).astype(COMPUTE_DTYPE)

    grid = (pb // tile_b,)
    flops = 2 * pb * (IN_PAD * WIDE + 3 * WIDE * WIDE)
    bytes_accessed = (xp.size * xp.dtype.itemsize
                      + slab.size * slab.dtype.itemsize
                      + pb * WIDE * 4)

    out_padded = pl.pallas_call(
        mlp_kernel,
        out_shape=jax.ShapeDtypeStruct((pb, WIDE), jnp.float32),
        grid=grid,
        in_specs=[
            pl.BlockSpec((tile_b, IN_PAD), lambda i: (i, 0)),       # x: pipelined per tile
            pl.BlockSpec((SLAB_ROWS, WIDE), lambda i: (0, 0)),      # params: DMA once, resident
        ],
        out_specs=pl.BlockSpec((tile_b, WIDE), lambda i: (i, 0)),   # lane-dense output block
        compiler_params=pltpu.CompilerParams(
            dimension_semantics=("parallel",),                      # megacore sharding on v7x
        ),
        cost_estimate=pl.CostEstimate(
            flops=flops, transcendentals=0, bytes_accessed=bytes_accessed),
    )(xp, slab)

    return out_padded[:batch, :OUTPUT_DIM]


def init_params(key):
    """Deterministic init mimicking nn.Linear's uniform(-1/sqrt(fan_in), 1/sqrt(fan_in)).

    Returns PyTorch-layout params: W of shape (out_features, in_features), b of (out_features,).
    """
    dims = [INPUT_DIM] + HIDDEN_LAYERS + [OUTPUT_DIM]
    params = []
    for i in range(len(dims) - 1):
        fan_in, fan_out = dims[i], dims[i + 1]
        key, kw, kb = jax.random.split(key, 3)
        bound = float(fan_in) ** -0.5
        w = jax.random.uniform(kw, (fan_out, fan_in), jnp.float32, -bound, bound)
        b = jax.random.uniform(kb, (fan_out,), jnp.float32, -bound, bound)
        params.append((w, b))
    return params


def reference_forward_f32(x, params):
    """Pure f32 reference matching the PyTorch module exactly."""
    h = x
    n = len(params)
    for i, (w, b) in enumerate(params):
        h = h @ w.T + b
        if i < n - 1:
            h = jnp.maximum(h, 0.0)
    return h


def reference_forward_matched(x, params):
    """Reference that mirrors the kernel's numerics (bf16 dot inputs, f32 accumulate)."""
    h = x.astype(COMPUTE_DTYPE)
    n = len(params)
    for i, (w, b) in enumerate(params):
        wt = w.T.astype(COMPUTE_DTYPE)
        bc = b.astype(COMPUTE_DTYPE)
        h = jnp.dot(h, wt, preferred_element_type=jnp.float32) + bc
        if i < n - 1:
            h = jnp.maximum(h, 0.0).astype(COMPUTE_DTYPE)
    return h


def _check(x, params, slab, tile_b=DEFAULT_TILE_B):
    out = jax.block_until_ready(logistic_regression_forward(x, slab, tile_b=tile_b))
    assert out.shape == (x.shape[0], OUTPUT_DIM), out.shape
    ref_m = reference_forward_matched(x, params)
    ref_f = reference_forward_f32(x, params)
    err_m = float(jnp.max(jnp.abs(out - ref_m)))
    err_f = float(jnp.max(jnp.abs(out - ref_f)))
    # Exact-math check against the bf16-matched reference.
    assert jnp.allclose(out, ref_m, atol=1e-2, rtol=1e-2), f"matched ref mismatch: {err_m}"
    # Loose sanity check against the true f32 (PyTorch-semantics) reference
    # (tolerance accounts for bf16 weight/activation quantization).
    assert jnp.allclose(out, ref_f, atol=2e-1, rtol=2e-1), f"f32 ref mismatch: {err_f}"
    return out


if __name__ == "__main__":
    key = jax.random.PRNGKey(0)
    key, kx, kx2 = jax.random.split(key, 3)
    params = init_params(key)
    slab = pack_params(params)

    # Small primary test (single-tile grid).
    batch = 8
    x = jax.random.normal(kx, (batch, INPUT_DIM), jnp.float32)
    _check(x, params, slab)

    # Small multi-tile / ragged-batch test exercising the grid + padding path.
    x2 = jax.random.normal(kx2, (300, INPUT_DIM), jnp.float32)
    _check(x2, params, slab, tile_b=128)   # 3 grid steps, ragged last tile padded

    print("KERNEL_OK")
</pallas_src>

<mosaic_0001>
module attributes {stable_mosaic.version = 11 : i64} {
  func.func @mlp_kernel(%arg0: i32, %arg1: memref<8x16xbf16, #tpu.memory_space<vmem>>, %arg2: memref<408x128xbf16, #tpu.memory_space<vmem>>, %arg3: memref<8x128xf32, #tpu.memory_space<vmem>>) attributes {dimension_semantics = [#tpu.dimension_semantics<parallel>], iteration_bounds = array<i64: 1>, scalar_prefetch = 0 : i64, scratch_operands = 0 : i64, tpu.core_type = #tpu.core_type<tc>, window_params = [{transform_indices = @transform_0, window_bounds = array<i64: 8, 16>}, {pipeline_mode = #tpu.pipeline_mode<synchronous>, transform_indices = @transform_1, window_bounds = array<i64: 408, 128>}, {transform_indices = @transform_2, window_bounds = array<i64: 8, 128>}]} {
    %c0 = arith.constant 0 : index
    %c0_0 = arith.constant 0 : index
    %0 = vector.load %arg1[%c0, %c0_0] : memref<8x16xbf16, #tpu.memory_space<vmem>>, vector<8x16xbf16>
    %c0_1 = arith.constant 0 : index
    %c0_2 = arith.constant 0 : index
    %1 = vector.load %arg2[%c0_1, %c0_2] : memref<408x128xbf16, #tpu.memory_space<vmem>>, vector<16x128xbf16>
    %c16 = arith.constant 16 : index
    %c0_3 = arith.constant 0 : index
    %2 = vector.load %arg2[%c16, %c0_3] : memref<408x128xbf16, #tpu.memory_space<vmem>>, vector<128x128xbf16>
    %c144 = arith.constant 144 : index
    %c0_4 = arith.constant 0 : index
    %3 = vector.load %arg2[%c144, %c0_4] : memref<408x128xbf16, #tpu.memory_space<vmem>>, vector<128x128xbf16>
    %c272 = arith.constant 272 : index
    %c0_5 = arith.constant 0 : index
    %4 = vector.load %arg2[%c272, %c0_5] : memref<408x128xbf16, #tpu.memory_space<vmem>>, vector<128x128xbf16>
    %c400 = arith.constant 400 : index
    %c0_6 = arith.constant 0 : index
    %5 = vector.load %arg2[%c400, %c0_6] : memref<408x128xbf16, #tpu.memory_space<vmem>>, vector<1x128xbf16>
    %c401 = arith.constant 401 : index
    %c0_7 = arith.constant 0 : index
    %6 = vector.load %arg2[%c401, %c0_7] : memref<408x128xbf16, #tpu.memory_space<vmem>>, vector<1x128xbf16>
    %c402 = arith.constant 402 : index
    %c0_8 = arith.constant 0 : index
    %7 = vector.load %arg2[%c402, %c0_8] : memref<408x128xbf16, #tpu.memory_space<vmem>>, vector<1x128xbf16>
    %c403 = arith.constant 403 : index
    %c0_9 = arith.constant 0 : index
    %8 = vector.load %arg2[%c403, %c0_9] : memref<408x128xbf16, #tpu.memory_space<vmem>>, vector<1x128xbf16>
    %cst = arith.constant dense<0.000000e+00> : vector<8x128xf32>
    %9 = tpu.matmul %0, %1, %cst {dimension_numbers = #tpu.dot_dimension_numbers<[1], [0], [0], [1], [0, 0, 1, 1], [], []>} : vector<8x16xbf16>, vector<16x128xbf16>, vector<8x128xf32> -> vector<8x128xf32>
    %10 = arith.extf %5 : vector<1x128xbf16> to vector<1x128xf32>
    %11 = vector.broadcast %10 : vector<1x128xf32> to vector<8x128xf32>
    %12 = arith.addf %9, %11 : vector<8x128xf32>
    %cst_10 = arith.constant 0.000000e+00 : f32
    %13 = vector.broadcast %cst_10 : f32 to vector<8x128xf32>
    %14 = arith.maximumf %12, %13 : vector<8x128xf32>
    %15 = arith.truncf %14 : vector<8x128xf32> to vector<8x128xbf16>
    %cst_11 = arith.constant dense<0.000000e+00> : vector<8x128xf32>
    %16 = tpu.matmul %15, %2, %cst_11 {dimension_numbers = #tpu.dot_dimension_numbers<[1], [0], [0], [1], [0, 0, 1, 1], [], []>} : vector<8x128xbf16>, vector<128x128xbf16>, vector<8x128xf32> -> vector<8x128xf32>
    %17 = arith.extf %6 : vector<1x128xbf16> to vector<1x128xf32>
    %18 = vector.broadcast %17 : vector<1x128xf32> to vector<8x128xf32>
    %19 = arith.addf %16, %18 : vector<8x128xf32>
    %cst_12 = arith.constant 0.000000e+00 : f32
    %20 = vector.broadcast %cst_12 : f32 to vector<8x128xf32>
    %21 = arith.maximumf %19, %20 : vector<8x128xf32>
    %22 = arith.truncf %21 : vector<8x128xf32> to vector<8x128xbf16>
    %cst_13 = arith.constant dense<0.000000e+00> : vector<8x128xf32>
    %23 = tpu.matmul %22, %3, %cst_13 {dimension_numbers = #tpu.dot_dimension_numbers<[1], [0], [0], [1], [0, 0, 1, 1], [], []>} : vector<8x128xbf16>, vector<128x128xbf16>, vector<8x128xf32> -> vector<8x128xf32>
    %24 = arith.extf %7 : vector<1x128xbf16> to vector<1x128xf32>
    %25 = vector.broadcast %24 : vector<1x128xf32> to vector<8x128xf32>
    %26 = arith.addf %23, %25 : vector<8x128xf32>
    %cst_14 = arith.constant 0.000000e+00 : f32
    %27 = vector.broadcast %cst_14 : f32 to vector<8x128xf32>
    %28 = arith.maximumf %26, %27 : vector<8x128xf32>
    %29 = arith.truncf %28 : vector<8x128xf32> to vector<8x128xbf16>
    %cst_15 = arith.constant dense<0.000000e+00> : vector<8x128xf32>
    %30 = tpu.matmul %29, %4, %cst_15 {dimension_numbers = #tpu.dot_dimension_numbers<[1], [0], [0], [1], [0, 0, 1, 1], [], []>} : vector<8x128xbf16>, vector<128x128xbf16>, vector<8x128xf32> -> vector<8x128xf32>
    %31 = arith.extf %8 : vector<1x128xbf16> to vector<1x128xf32>
    %32 = vector.broadcast %31 : vector<1x128xf32> to vector<8x128xf32>
    %33 = arith.addf %30, %32 : vector<8x128xf32>
    %c0_16 = arith.constant 0 : index
    %c0_17 = arith.constant 0 : index
    %34 = vector.load %arg3[%c0_16, %c0_17] : memref<8x128xf32, #tpu.memory_space<vmem>>, vector<8x128xf32>
    tpu.vector_store %arg3[%c0_16, %c0_17], %33 {strides = array<i32>} : memref<8x128xf32, #tpu.memory_space<vmem>>, vector<8x128xf32>,
    return
  }
  func.func @transform_0(%arg0: i32) -> (i32, i32) {
    %c0_i32 = arith.constant 0 : i32
    %c0_i32_0 = arith.constant 0 : i32
    return %arg0, %c0_i32 : i32, i32
  }
  func.func @transform_1(%arg0: i32) -> (i32, i32) {
    %c0_i32 = arith.constant 0 : i32
    %c0_i32_0 = arith.constant 0 : i32
    %c0_i32_1 = arith.constant 0 : i32
    return %c0_i32, %c0_i32_0 : i32, i32
  }
  func.func @transform_2(%arg0: i32) -> (i32, i32) {
    %c0_i32 = arith.constant 0 : i32
    %c0_i32_0 = arith.constant 0 : i32
    return %arg0, %c0_i32 : i32, i32
  }
}

</mosaic_0001>

<llo_original>
// kernel: tpu_custom_call.1
$region0: #{tpu_custom_call.1}
  #allocation0 [shape = 'u32[]', space=smem, size = 0x4, offset = 0x4, fixed_abs, tag = 'smem constant byte address 0x4 - core index']
  #allocation1 [shape = 'u32[144,128]{1,0:T(1,128)}', space=vmem, size = 0x12000, scoped, tag = 'internal scratch']
  %s0 = inlined_call_operand.hbm [shape: bf16[8,16], index: 0, kind: input, shape index: {}]
  %s1 = inlined_call_operand.hbm [shape: bf16[408,128], index: 1, kind: input, shape index: {}]
  %s2 = inlined_call_operand.hbm [shape: f32[8,128], index: 2, kind: output, shape index: {}]
  %s3 = sld [smem:[#allocation0]]
  $region26: #{tpu_custom_call.1} parent=0
    _
  %s5 = ssub.s32 1, %s3
  %s6 = scalar_select 0, %s5, %s3
  $region1: #{tpu_custom_call.1} parent=0
    #allocation2 [shape = 'u8[2048]{0}', space=vmem, size = 0x800, scoped, tag = 'input window, operand 0, single buffered']
    #allocation3 [shape = 's32[1]{0}', space=sflag, size = 0x4, scoped, tag = 'scoped memory for tpu_custom_call.1']
    #allocation4 [shape = 's32[1]{0}', space=sflag, size = 0x4, scoped, tag = 'scoped memory for tpu_custom_call.1']
    #allocation5 [shape = 'u8[104448]{0}', space=vmem, size = 0x19800, scoped, tag = 'input window, operand 1, single buffered']
    #allocation6 [shape = 's32[1]{0}', space=sflag, size = 0x4, scoped, tag = 'scoped memory for tpu_custom_call.1']
    #allocation7 [shape = 'u8[4096]{0}', space=vmem, size = 0x1000, scoped, tag = 'output window, operand 0, single buffered']
    %7 = vsyncpa [#allocation3], 0
    %8 = vsyncpa [#allocation6], 0
    %9 = vsyncpa [#allocation4], 0
    // Predicated region
    $region2: #{tpu_custom_call.1} parent=1 // pred_check
      _
    $region3: #{tpu_custom_call.1} parent=1 // pred_check_branch
      %11 = sbr.rel (0) target = $region5
    $region4: #{tpu_custom_call.1} parent=1 // pred_region
      %s13 = ssub.s32 64, 64
      %14 = vsyncadd [#allocation3], %s13
      %s16 = sshll.u32 [#allocation2], 4
      %s17 = int_to_ptr.vmem [resolvable:$true] %s16
      %19 = dma.hbm_to_vmem [thread:$0]  %s0, 64, %s17, [#allocation3]
    $region5: #{tpu_custom_call.1} parent=1 // pred_fallthru
      _
    // Predicated region
    $region6: #{tpu_custom_call.1} parent=1 // pred_check
      _
    $region7: #{tpu_custom_call.1} parent=1 // pred_check_branch
      %21 = sbr.rel (0) target = $region9
    $region8: #{tpu_custom_call.1} parent=1 // pred_region
      %s23 = ssub.s32 3264, 3264
      %24 = vsyncadd [#allocation6], %s23
      %s25 = sshll.u32 [#allocation5], 4
      %s26 = int_to_ptr.vmem [resolvable:$true] %s25
      %31 = dma.hbm_to_vmem [thread:$0]  %s1, 3264, %s26, [#allocation6], 64, 64, 4
    $region9: #{tpu_custom_call.1} parent=1 // pred_fallthru
      _
    // Predicated region
    $region10: #{tpu_custom_call.1} parent=1 // pred_check
      _
    $region11: #{tpu_custom_call.1} parent=1 // pred_check_branch
      %33 = sbr.rel (0) target = $region13
    $region12: #{tpu_custom_call.1} parent=1 // pred_region
      %34 = dma.done [#allocation3], 64
    $region13: #{tpu_custom_call.1} parent=1 // pred_fallthru
      _
    // Predicated region
    $region14: #{tpu_custom_call.1} parent=1 // pred_check
      _
    $region15: #{tpu_custom_call.1} parent=1 // pred_check_branch
      %36 = sbr.rel (0) target = $region17
    $region16: #{tpu_custom_call.1} parent=1 // pred_region
      %37 = dma.done [#allocation6], 3264
    $region17: #{tpu_custom_call.1} parent=1 // pred_fallthru
      _
    %v39 = vld [vmem:[#allocation2] sm:$0xf]
    %v40 = vld [vmem:[#allocation5] sm:$0xf]
    %v41 = vld [vmem:[#allocation5 + $0x4] sm:$0xf]
    %v42 = vld [vmem:[#allocation5 + $0x8] sm:$0xf]
    %v43 = vld [vmem:[#allocation5 + $0xc] sm:$0xf]
    %v44 = vld [vmem:[#allocation5 + $0x10] sm:$0xf]
    %v45 = vld [vmem:[#allocation5 + $0x14] sm:$0xf]
    %v46 = vld [vmem:[#allocation5 + $0x18] sm:$0xf]
    %v47 = vld [vmem:[#allocation5 + $0x1c] sm:$0xf]
    %v48 = vld [vmem:[#allocation5 + $0x20] sm:$0xf]
    %v49 = vld [vmem:[#allocation5 + $0x24] sm:$0xf]
    %v50 = vld [vmem:[#allocation5 + $0x28] sm:$0xf]
    %v51 = vld [vmem:[#allocation5 + $0x2c] sm:$0xf]
    %v52 = vld [vmem:[#allocation5 + $0x30] sm:$0xf]
    %v53 = vld [vmem:[#allocation5 + $0x34] sm:$0xf]
    %v54 = vld [vmem:[#allocation5 + $0x38] sm:$0xf]
    %v55 = vld [vmem:[#allocation5 + $0x3c] sm:$0xf]
    %v56 = vld [vmem:[#allocation5 + $0x40] sm:$0xf]
    %v57 = vld [vmem:[#allocation5 + $0x44] sm:$0xf]
    %v58 = vld [vmem:[#allocation5 + $0x48] sm:$0xf]
    %v59 = vld [vmem:[#allocation5 + $0x4c] sm:$0xf]
    %v60 = vld [vmem:[#allocation5 + $0x50] sm:$0xf]
    %v61 = vld [vmem:[#allocation5 + $0x54] sm:$0xf]
    %v62 = vld [vmem:[#allocation5 + $0x58] sm:$0xf]
    %v63 = vld [vmem:[#allocation5 + $0x5c] sm:$0xf]
    %v64 = vld [vmem:[#allocation5 + $0x60] sm:$0xf]
    %v65 = vld [vmem:[#allocation5 + $0x64] sm:$0xf]
    %v66 = vld [vmem:[#allocation5 + $0x68] sm:$0xf]
    %v67 = vld [vmem:[#allocation5 + $0x6c] sm:$0xf]
    %v68 = vld [vmem:[#allocation5 + $0x70] sm:$0xf]
    %v69 = vld [vmem:[#allocation5 + $0x74] sm:$0xf]
    %v70 = vld [vmem:[#allocation5 + $0x78] sm:$0xf]
    %v71 = vld [vmem:[#allocation5 + $0x7c] sm:$0xf]
    %v72 = vld [vmem:[#allocation5 + $0x80] sm:$0xf]
    %v73 = vld [vmem:[#allocation5 + $0x84] sm:$0xf]
    %v74 = vld [vmem:[#allocation5 + $0x88] sm:$0xf]
    %v75 = vld [vmem:[#allocation5 + $0x8c] sm:$0xf]
    %v76 = vld [vmem:[#allocation5 + $0x90] sm:$0xf]
    %v77 = vld [vmem:[#allocation5 + $0x94] sm:$0xf]
    %v78 = vld [vmem:[#allocation5 + $0x98] sm:$0xf]
    %v79 = vld [vmem:[#allocation5 + $0x9c] sm:$0xf]
    %v80 = vld [vmem:[#allocation5 + $0xa0] sm:$0xf]
    %v81 = vld [vmem:[#allocation5 + $0xa4] sm:$0xf]
    %v82 = vld [vmem:[#allocation5 + $0xa8] sm:$0xf]
    %v83 = vld [vmem:[#allocation5 + $0xac] sm:$0xf]
    %v84 = vld [vmem:[#allocation5 + $0xb0] sm:$0xf]
    %v85 = vld [vmem:[#allocation5 + $0xb4] sm:$0xf]
    %v86 = vld [vmem:[#allocation5 + $0xb8] sm:$0xf]
    %v87 = vld [vmem:[#allocation5 + $0xbc] sm:$0xf]
    %v88 = vld [vmem:[#allocation5 + $0xc0] sm:$0xf]
    %v89 = vld [vmem:[#allocation5 + $0xc4] sm:$0xf]
    %v90 = vld [vmem:[#allocation5 + $0xc8] sm:$0x1]
    %v91 = vld [vmem:[#allocation5 + $0xc8] sm:$0x2]
    %v92 = vunpack.c.l.bf16 %v90
    %v93 = vlaneseq
    %v94 = vshrl.u32 %v93, 7
    %v95 = vsub.s32 0, %v94
    %v96 = vrot.slane %v92, %v95
    %v99 = vunpack.c.l.b16 %v40
    %v100 = vunpack.c.l.b16 %v41
    %v101 = vpack.c.b16 %v100, %v99
    %vm103 = vcmask 130048
    %v105 = vsel %vm103, %v39, 0
    %107 = vmatprep.subr.bf16.mxu0 0
    %108 = vmatpush1.bf16.msra.mxu0 0
    %109 = vmatprep.subr.bf16.mxu0 0
    %110 = vmatpush1.bf16.msra.mxu0 0
    %111 = vmatprep.subr.bf16.mxu0 0
    %112 = vmatpush1.bf16.msra.mxu0 0
    %113 = vmatprep.subr.bf16.mxu0 0
    %114 = vmatpush1.bf16.msra.mxu0 0
    %115 = vmatprep.subr.bf16.mxu0 0
    %116 = vmatpush1.bf16.msra.mxu0 0
    %117 = vmatprep.subr.bf16.mxu0 0
    %118 = vmatpush1.bf16.msra.mxu0 0
    %119 = vmatprep.subr.bf16.mxu0 0
    %120 = vmatpush1.bf16.msra.mxu0 0
    %121 = vmatprep.subr.bf16.mxu0 0
    %122 = vmatpush1.bf16.msra.mxu0 %v101
    %123 = vmatprep.subr.bf16.mxu0 0
    %124 = vmatpush2.bf16.msra.mxu0 0
    %125 = vmatprep.subr.bf16.mxu0 0
    %126 = vmatpush2.bf16.msra.mxu0 0
    %127 = vmatprep.subr.bf16.mxu0 0
    %128 = vmatpush2.bf16.msra.mxu0 0
    %129 = vmatprep.subr.bf16.mxu0 0
    %130 = vmatpush2.bf16.msra.mxu0 0
    %131 = vmatprep.subr.bf16.mxu0 0
    %132 = vmatpush2.bf16.msra.mxu0 0
    %133 = vmatprep.subr.bf16.mxu0 0
    %134 = vmatpush2.bf16.msra.mxu0 0
    %135 = vmatprep.subr.bf16.mxu0 0
    %136 = vmatpush2.bf16.msra.mxu0 0
    %137 = vmatprep.subr.bf16.mxu0 0
    %138 = vmatpush2.bf16.msra.mxu0 0
    %139 = vmatprep.mubr.bf16.mxu0 0
    %140 = vmatmul.mubr.bf16.gmra.mxu0 %v105
    %v141 = vpop.f32.mrf.mxu0
    %v142 = vadd.f32 %v96, %v141
    %v143 = vpop.f32.mrf.mxu0
    %v144 = vpop.f32.mrf.mxu0
    %v145 = vpop.f32.mrf.mxu0
    %146 = vdwg.mxu0
    %v147 = vmax.f32 %v142, 0.0
    %v148 = vpack.c.bf16 %v147, %v147
    %v149 = vlaneseq
    %v150 = vshrl.u32 %v149, 7
    %v151 = vsub.s32 1, %v150
    %v152 = vrot.slane %v92, %v151
    %v169 = vunpack.c.l.b16 %v42
    %v170 = vunpack.c.l.b16 %v43
    %v171 = vunpack.c.l.b16 %v44
    %v172 = vunpack.c.l.b16 %v45
    %v173 = vunpack.c.l.b16 %v46
    %v174 = vunpack.c.l.b16 %v47
    %v175 = vunpack.c.l.b16 %v48
    %v176 = vunpack.c.l.b16 %v49
    %v177 = vunpack.c.l.b16 %v50
    %v178 = vunpack.c.l.b16 %v51
    %v179 = vunpack.c.l.b16 %v52
    %v180 = vunpack.c.l.b16 %v53
    %v181 = vunpack.c.l.b16 %v54
    %v182 = vunpack.c.l.b16 %v55
    %v183 = vunpack.c.l.b16 %v56
    %v184 = vunpack.c.l.b16 %v57
    %v185 = vpack.c.b16 %v170, %v169
    %v186 = vpack.c.b16 %v172, %v171
    %v187 = vpack.c.b16 %v174, %v173
    %v188 = vpack.c.b16 %v176, %v175
    %v189 = vpack.c.b16 %v178, %v177
    %v190 = vpack.c.b16 %v180, %v179
    %v191 = vpack.c.b16 %v182, %v181
    %v192 = vpack.c.b16 %v184, %v183
    %201 = vmatprep.subr.bf16.mxu0 0
    %202 = vmatpush1.bf16.msra.mxu0 %v192
    %203 = vmatprep.subr.bf16.mxu0 0
    %204 = vmatpush1.bf16.msra.mxu0 %v191
    %205 = vmatprep.subr.bf16.mxu0 0
    %206 = vmatpush1.bf16.msra.mxu0 %v190
    %207 = vmatprep.subr.bf16.mxu0 0
    %208 = vmatpush1.bf16.msra.mxu0 %v189
    %209 = vmatprep.subr.bf16.mxu0 0
    %210 = vmatpush1.bf16.msra.mxu0 %v188
    %211 = vmatprep.subr.bf16.mxu0 0
    %212 = vmatpush1.bf16.msra.mxu0 %v187
    %213 = vmatprep.subr.bf16.mxu0 0
    %214 = vmatpush1.bf16.msra.mxu0 %v186
    %215 = vmatprep.subr.bf16.mxu0 0
    %216 = vmatpush1.bf16.msra.mxu0 %v185
    %217 = vmatprep.subr.bf16.mxu0 0
    %218 = vmatpush2.bf16.msra.mxu0 0
    %219 = vmatprep.subr.bf16.mxu0 0
    %220 = vmatpush2.bf16.msra.mxu0 0
    %221 = vmatprep.subr.bf16.mxu0 0
    %222 = vmatpush2.bf16.msra.mxu0 0
    %223 = vmatprep.subr.bf16.mxu0 0
    %224 = vmatpush2.bf16.msra.mxu0 0
    %225 = vmatprep.subr.bf16.mxu0 0
    %226 = vmatpush2.bf16.msra.mxu0 0
    %227 = vmatprep.subr.bf16.mxu0 0
    %228 = vmatpush2.bf16.msra.mxu0 0
    %229 = vmatprep.subr.bf16.mxu0 0
    %230 = vmatpush2.bf16.msra.mxu0 0
    %231 = vmatprep.subr.bf16.mxu0 0
    %232 = vmatpush2.bf16.msra.mxu0 0
    %233 = vmatprep.mubr.bf16.mxu0 0
    %234 = vmatmul.mubr.bf16.gmra.mxu0 %v148
    %v235 = vpop.f32.mrf.mxu0
    %v236 = vadd.f32 %v152, %v235
    %v237 = vpop.f32.mrf.mxu0
    %v238 = vpop.f32.mrf.mxu0
    %v239 = vpop.f32.mrf.mxu0
    %240 = vdwg.mxu0
    %v241 = vmax.f32 %v236, 0.0
    %v242 = vpack.c.bf16 %v241, %v241
    %v243 = vunpack.c.l.bf16 %v91
    %v244 = vlaneseq
    %v245 = vshrl.u32 %v244, 7
    %v246 = vsub.s32 2, %v245
    %v247 = vrot.slane %v243, %v246
    %v264 = vunpack.c.l.b16 %v58
    %v265 = vunpack.c.l.b16 %v59
    %v266 = vunpack.c.l.b16 %v60
    %v267 = vunpack.c.l.b16 %v61
    %v268 = vunpack.c.l.b16 %v62
    %v269 = vunpack.c.l.b16 %v63
    %v270 = vunpack.c.l.b16 %v64
    %v271 = vunpack.c.l.b16 %v65
    %v272 = vunpack.c.l.b16 %v66
    %v273 = vunpack.c.l.b16 %v67
    %v274 = vunpack.c.l.b16 %v68
    %v275 = vunpack.c.l.b16 %v69
    %v276 = vunpack.c.l.b16 %v70
    %v277 = vunpack.c.l.b16 %v71
    %v278 = vunpack.c.l.b16 %v72
    %v279 = vunpack.c.l.b16 %v73
    %v280 = vpack.c.b16 %v265, %v264
    %v281 = vpack.c.b16 %v267, %v266
    %v282 = vpack.c.b16 %v269, %v268
    %v283 = vpack.c.b16 %v271, %v270
    %v284 = vpack.c.b16 %v273, %v272
    %v285 = vpack.c.b16 %v275, %v274
    %v286 = vpack.c.b16 %v277, %v276
    %v287 = vpack.c.b16 %v279, %v278
    %296 = vmatprep.subr.bf16.mxu0 0
    %297 = vmatpush1.bf16.msra.mxu0 %v287
    %298 = vmatprep.subr.bf16.mxu0 0
    %299 = vmatpush1.bf16.msra.mxu0 %v286
    %300 = vmatprep.subr.bf16.mxu0 0
    %301 = vmatpush1.bf16.msra.mxu0 %v285
    %302 = vmatprep.subr.bf16.mxu0 0
    %303 = vmatpush1.bf16.msra.mxu0 %v284
    %304 = vmatprep.subr.bf16.mxu0 0
    %305 = vmatpush1.bf16.msra.mxu0 %v283
    %306 = vmatprep.subr.bf16.mxu0 0
    %307 = vmatpush1.bf16.msra.mxu0 %v282
    %308 = vmatprep.subr.bf16.mxu0 0
    %309 = vmatpush1.bf16.msra.mxu0 %v281
    %310 = vmatprep.subr.bf16.mxu0 0
    %311 = vmatpush1.bf16.msra.mxu0 %v280
    %312 = vmatprep.subr.bf16.mxu0 0
    %313 = vmatpush2.bf16.msra.mxu0 0
    %314 = vmatprep.subr.bf16.mxu0 0
    %315 = vmatpush2.bf16.msra.mxu0 0
    %316 = vmatprep.subr.bf16.mxu0 0
    %317 = vmatpush2.bf16.msra.mxu0 0
    %318 = vmatprep.subr.bf16.mxu0 0
    %319 = vmatpush2.bf16.msra.mxu0 0
    %320 = vmatprep.subr.bf16.mxu0 0
    %321 = vmatpush2.bf16.msra.mxu0 0
    %322 = vmatprep.subr.bf16.mxu0 0
    %323 = vmatpush2.bf16.msra.mxu0 0
    %324 = vmatprep.subr.bf16.mxu0 0
    %325 = vmatpush2.bf16.msra.mxu0 0
    %326 = vmatprep.subr.bf16.mxu0 0
    %327 = vmatpush2.bf16.msra.mxu0 0
    %328 = vmatprep.mubr.bf16.mxu0 0
    %329 = vmatmul.mubr.bf16.gmra.mxu0 %v242
    %v330 = vpop.f32.mrf.mxu0
    %v331 = vadd.f32 %v247, %v330
    %v332 = vpop.f32.mrf.mxu0
    %v333 = vpop.f32.mrf.mxu0
    %v334 = vpop.f32.mrf.mxu0
    %335 = vdwg.mxu0
    %v336 = vmax.f32 %v331, 0.0
    %v337 = vpack.c.bf16 %v336, %v336
    %v338 = vlaneseq
    %v339 = vshrl.u32 %v338, 7
    %v340 = vsub.s32 3, %v339
    %v341 = vrot.slane %v243, %v340
    %v358 = vunpack.c.l.b16 %v74
    %v359 = vunpack.c.l.b16 %v75
    %v360 = vunpack.c.l.b16 %v76
    %v361 = vunpack.c.l.b16 %v77
    %v362 = vunpack.c.l.b16 %v78
    %v363 = vunpack.c.l.b16 %v79
    %v364 = vunpack.c.l.b16 %v80
    %v365 = vunpack.c.l.b16 %v81
    %v366 = vunpack.c.l.b16 %v82
    %v367 = vunpack.c.l.b16 %v83
    %v368 = vunpack.c.l.b16 %v84
    %v369 = vunpack.c.l.b16 %v85
    %v370 = vunpack.c.l.b16 %v86
    %v371 = vunpack.c.l.b16 %v87
    %v372 = vunpack.c.l.b16 %v88
    %v373 = vunpack.c.l.b16 %v89
    %v374 = vpack.c.b16 %v359, %v358
    %v375 = vpack.c.b16 %v361, %v360
    %v376 = vpack.c.b16 %v363, %v362
    %v377 = vpack.c.b16 %v365, %v364
    %v378 = vpack.c.b16 %v367, %v366
    %v379 = vpack.c.b16 %v369, %v368
    %v380 = vpack.c.b16 %v371, %v370
    %v381 = vpack.c.b16 %v373, %v372
    %390 = vmatprep.subr.bf16.mxu0 0
    %391 = vmatpush1.bf16.msra.mxu0 %v381
    %392 = vmatprep.subr.bf16.mxu0 0
    %393 = vmatpush1.bf16.msra.mxu0 %v380
    %394 = vmatprep.subr.bf16.mxu0 0
    %395 = vmatpush1.bf16.msra.mxu0 %v379
    %396 = vmatprep.subr.bf16.mxu0 0
    %397 = vmatpush1.bf16.msra.mxu0 %v378
    %398 = vmatprep.subr.bf16.mxu0 0
    %399 = vmatpush1.bf16.msra.mxu0 %v377
    %400 = vmatprep.subr.bf16.mxu0 0
    %401 = vmatpush1.bf16.msra.mxu0 %v376
    %402 = vmatprep.subr.bf16.mxu0 0
    %403 = vmatpush1.bf16.msra.mxu0 %v375
    %404 = vmatprep.subr.bf16.mxu0 0
    %405 = vmatpush1.bf16.msra.mxu0 %v374
    %406 = vmatprep.subr.bf16.mxu0 0
    %407 = vmatpush2.bf16.msra.mxu0 0
    %408 = vmatprep.subr.bf16.mxu0 0
    %409 = vmatpush2.bf16.msra.mxu0 0
    %410 = vmatprep.subr.bf16.mxu0 0
    %411 = vmatpush2.bf16.msra.mxu0 0
    %412 = vmatprep.subr.bf16.mxu0 0
    %413 = vmatpush2.bf16.msra.mxu0 0
    %414 = vmatprep.subr.bf16.mxu0 0
    %415 = vmatpush2.bf16.msra.mxu0 0
    %416 = vmatprep.subr.bf16.mxu0 0
    %417 = vmatpush2.bf16.msra.mxu0 0
    %418 = vmatprep.subr.bf16.mxu0 0
    %419 = vmatpush2.bf16.msra.mxu0 0
    %420 = vmatprep.subr.bf16.mxu0 0
    %421 = vmatpush2.bf16.msra.mxu0 0
    %422 = vmatprep.mubr.bf16.mxu0 0
    %423 = vmatmul.mubr.bf16.gmra.mxu0 %v337
    %v424 = vpop.f32.mrf.mxu0
    %v425 = vadd.f32 %v341, %v424
    %v426 = vpop.f32.mrf.mxu0
    %v427 = vpop.f32.mrf.mxu0
    %v428 = vpop.f32.mrf.mxu0
    %429 = vdwg.mxu0
    %430 = vst [vmem:[#allocation7] sm:$0xff] %v425
    // Predicated region
    $region18: #{tpu_custom_call.1} parent=1 // pred_check
      _
    $region19: #{tpu_custom_call.1} parent=1 // pred_check_branch
      %432 = sbr.rel (0) target = $region21
    $region20: #{tpu_custom_call.1} parent=1 // pred_region
      %s434 = ssub.s32 128, 128
      %435 = vsyncadd [#allocation4], %s434
      %s437 = sshll.u32 [#allocation7], 4
      %s438 = int_to_ptr.vmem [resolvable:$true] %s437
      %440 = dma.vmem_to_hbm [thread:$0]  %s438, 128, %s2, [#allocation4]
    $region21: #{tpu_custom_call.1} parent=1 // pred_fallthru
      _
    // Predicated region
    $region22: #{tpu_custom_call.1} parent=1 // pred_check
      _
    $region23: #{tpu_custom_call.1} parent=1 // pred_check_branch
      %442 = sbr.rel (0) target = $region25
    $region24: #{tpu_custom_call.1} parent=1 // pred_region
      %443 = dma.done [#allocation4], 128
    $region25: #{tpu_custom_call.1} parent=1 // pred_fallthru
      _
    %444 = vsyncpa [#allocation3], 1
    %445 = vsyncpa [#allocation6], 1
    %446 = vsyncpa [#allocation4], 1

</llo_original>
